<compile_context>
chip_gen: v5e
topology: v5e:2x2
jax: 0.10.0
libtpu: 0.0.40
codegen_flags: <defaults>
</compile_context>

<pallas_src>
import jax
import jax.numpy as jnp
from jax.experimental import pallas as pl
from jax.experimental.pallas import tpu as pltpu


LANE = 128  # TPU lane width; last dim of every block must be a multiple of this.


# ----------------------------------------------------------------------------
# Tiling helpers (dtype- and generation-aware).
# ----------------------------------------------------------------------------
def _sublane_multiple(dtype) -> int:
    """Minimum second-to-last-dim multiple for a vreg-dense block of `dtype`."""
    itemsize = jnp.dtype(dtype).itemsize
    return {4: 8, 2: 16, 1: 32}.get(itemsize, 8)


def _target_block_bytes() -> int:
    """Per-buffer block-size target, tuned per TPU generation.

    v5e (~0.8 TB/s HBM): 2 MiB already puts the ~0.35us/step overhead <10%.
    v6e (~1.4 TB/s):     4 MiB halves grid steps for a ~5-8% win.
    v7x (~3.2 TB/s/TC):  8 MiB cuts per-step overhead to ~5% while keeping
                         4 in-flight buffers (= 32 MiB) under 64 MiB VMEM.
    """
    try:
        kind = jax.devices()[0].device_kind.lower()
    except Exception:
        return 4 << 20
    if "v4" in kind or "v5" in kind:
        return 2 << 20
    if "v6" in kind:
        return 4 << 20
    return 8 << 20


def _choose_tile_rows(R: int, C: int, dtype) -> int:
    """Pick a sublane-aligned tile_rows that divides R exactly (no padding)."""
    sub = _sublane_multiple(dtype)
    row_bytes = C * jnp.dtype(dtype).itemsize
    max_rows = max(sub, (_target_block_bytes() // row_bytes) // sub * sub)

    if R <= max_rows:
        # Small/medium input: prefer >= 2 grid steps when an aligned even
        # split exists, so ("parallel",) can use both TensorCores on v7x.
        half = R // 2
        if R % 2 == 0 and half % sub == 0:
            return half
        return R  # single full-array block (always a legal block shape)

    # Large input: largest sublane-aligned divisor of R not exceeding max_rows,
    # so the grid divides exactly (no padded remainder block read/written).
    t = max_rows
    while t >= sub:
        if R % t == 0:
            return t
        t -= sub
    return R  # no aligned divisor; fall back to one full-array block


# ----------------------------------------------------------------------------
# Pallas kernel: tiled identity / pass-through (the only compute a BaseModel
# defines is "nothing"; this kernel is the scaffold a subclass would fill in).
# ----------------------------------------------------------------------------
def _passthrough_kernel(x_ref, o_ref):
    o_ref[...] = x_ref[...]


def pallas_passthrough(x_2d, *, tile_rows=None, donate_input=False):
    """Tiled, lane-dense VMEM pass-through.

    x_2d: (R, C) array with C % 128 == 0.  The grid divides R exactly.
    donate_input: alias the input HBM buffer as the output.  Only safe when
    the caller no longer needs `x_2d` (it becomes a silent clobber once a
    subclass writes real results), hence opt-in.
    """
    R, C = x_2d.shape
    assert C % LANE == 0, "lane dim must be a multiple of 128"
    if tile_rows is None:
        tile_rows = _choose_tile_rows(R, C, x_2d.dtype)
    assert R % tile_rows == 0, "tile_rows must divide rows exactly"
    sub = _sublane_multiple(x_2d.dtype)
    assert tile_rows == R or tile_rows % sub == 0, "tile rows must be sublane-aligned"

    block_bytes = tile_rows * C * jnp.dtype(x_2d.dtype).itemsize
    # 2 in + 2 out double-buffered blocks plus headroom; capped under v7x's
    # 64 MiB physical VMEM, and above v5e's 16 MiB default scoped limit.
    vmem_limit = min(48 << 20, max(32 << 20, 6 * block_bytes))

    return pl.pallas_call(
        _passthrough_kernel,
        out_shape=jax.ShapeDtypeStruct((R, C), x_2d.dtype),
        grid_spec=pl.GridSpec(
            grid=(R // tile_rows,),
            in_specs=[pl.BlockSpec((tile_rows, C), lambda i: (i, 0))],
            out_specs=pl.BlockSpec((tile_rows, C), lambda i: (i, 0)),
        ),
        input_output_aliases=({0: 0} if donate_input else {}),
        compiler_params=pltpu.CompilerParams(
            # Single grid axis is parallel -> shards across both TCs on v7x.
            dimension_semantics=("parallel",),
            vmem_limit_bytes=vmem_limit,
        ),
    )(x_2d)


# ----------------------------------------------------------------------------
# BaseModel: faithful port of the PyTorch abstract base class.
# ----------------------------------------------------------------------------
class BaseModel:
    def __init__(self, cfg, log):
        self.cfg = cfg
        self.log = log
        # No parameters to initialize: the PyTorch __init__ defines none.

    def forward(self, *args, **kwargs):
        # Exact semantics of the reference module.
        raise NotImplementedError("forward has not been implemented!")

    # TODO(synk): concrete subclasses should override forward() and route
    # their matmul/conv/reduction hot paths through Pallas kernels (MXU work
    # should use 128x128-aligned tiles, bf16 inputs, f32 accumulation).
    def _demo_passthrough(self, x_nchw, *, force_kernel=False):
        """Scaffold showing how a subclass routes NCHW data through Pallas.

        The base class computes nothing, so by default this is a no-op that
        returns the input untouched (an aliased identity kernel is pure
        wasted HBM bandwidth).  `force_kernel=True` actually launches the
        Pallas kernel -- that is what a subclass with real compute would do.
        """
        if not force_kernel:
            return x_nchw

        n, c, h, w = x_nchw.shape

        # Lane-dense slab that exactly divides the data: no jnp.pad on the way
        # in and no slice on the way out (each of those would be a full extra
        # HBM read+write pass on top of the kernel's own traffic).
        if w % LANE == 0:
            slab_shape = (n * c * h, w)
        elif (h * w) % LANE == 0:
            slab_shape = (n * c, h * w)
        elif (c * h * w) % LANE == 0:
            slab_shape = (n, c * h * w)
        else:
            # TODO(synk): ragged tail -- handle with a masked last block
            # (pltpu.store with mask / pl.BoundedSlice) instead of padding.
            slab_shape = None

        if slab_shape is None:
            return x_nchw

        slab = x_nchw.reshape(slab_shape)
        # No donation here: the caller's `x_nchw` must stay valid.
        out = pallas_passthrough(slab)
        return out.reshape(n, c, h, w)


if __name__ == "__main__":
    key = jax.random.PRNGKey(0)
    x = jax.random.normal(key, (2, 4, 16, 16), dtype=jnp.float32)  # NCHW

    model = BaseModel(cfg={}, log=None)

    # 1) Faithful semantics: forward() raises NotImplementedError.
    try:
        model.forward(x)
        raise RuntimeError("BaseModel.forward should have raised")
    except NotImplementedError:
        pass

    # 2) Default base-class path: no kernel launch, input returned untouched.
    y_fast = model._demo_passthrough(x)
    assert y_fast is x

    # 3) Force the Pallas scaffold kernel once and verify it round-trips data.
    y = model._demo_passthrough(x, force_kernel=True)
    y = jax.block_until_ready(y)
    assert y.shape == x.shape and y.dtype == x.dtype
    assert bool(jnp.allclose(y, x))

    print("KERNEL_OK")
</pallas_src>

<mosaic_0001>
module attributes {stable_mosaic.version = 11 : i64} {
  func.func @_passthrough_kernel(%arg0: i32, %arg1: memref<8x256xf32, #tpu.memory_space<vmem>>, %arg2: memref<8x256xf32, #tpu.memory_space<vmem>>) attributes {dimension_semantics = [#tpu.dimension_semantics<parallel>], iteration_bounds = array<i64: 1>, scalar_prefetch = 0 : i64, scratch_operands = 0 : i64, tpu.core_type = #tpu.core_type<tc>, window_params = [{transform_indices = @transform_0, window_bounds = array<i64: 8, 256>}, {transform_indices = @transform_1, window_bounds = array<i64: 8, 256>}]} {
    %c0 = arith.constant 0 : index
    %c0_0 = arith.constant 0 : index
    %0 = vector.load %arg1[%c0, %c0_0] : memref<8x256xf32, #tpu.memory_space<vmem>>, vector<8x256xf32>
    %c0_1 = arith.constant 0 : index
    %c0_2 = arith.constant 0 : index
    %1 = vector.load %arg2[%c0_1, %c0_2] : memref<8x256xf32, #tpu.memory_space<vmem>>, vector<8x256xf32>
    tpu.vector_store %arg2[%c0_1, %c0_2], %0 {strides = array<i32>} : memref<8x256xf32, #tpu.memory_space<vmem>>, vector<8x256xf32>,
    return
  }
  func.func @transform_0(%arg0: i32) -> (i32, i32) {
    %c0_i32 = arith.constant 0 : i32
    %c0_i32_0 = arith.constant 0 : i32
    return %arg0, %c0_i32 : i32, i32
  }
  func.func @transform_1(%arg0: i32) -> (i32, i32) {
    %c0_i32 = arith.constant 0 : i32
    %c0_i32_0 = arith.constant 0 : i32
    return %arg0, %c0_i32 : i32, i32
  }
}

</mosaic_0001>

<llo_original>
// kernel: tpu_custom_call.1
$region0: #{tpu_custom_call.1}
  #allocation0 [shape = 'u32[]', space=smem, size = 0x4, offset = 0x4, fixed_abs, tag = 'smem constant byte address 0x4 - core index']
  #allocation1 [shape = 'u32[72,128]{1,0:T(1,128)}', space=vmem, size = 0x9000, scoped, tag = 'internal scratch']
  %s0 = inlined_call_operand.hbm [shape: f32[8,256], index: 0, kind: input, shape index: {}]
  %s1 = inlined_call_operand.hbm [shape: f32[8,256], index: 1, kind: output, shape index: {}]
  %s2 = sld [smem:[#allocation0]]
  $region18: #{tpu_custom_call.1} parent=0
    _
  %s4 = ssub.s32 1, %s2
  %s5 = scalar_select 0, %s4, %s2
  $region1: #{tpu_custom_call.1} parent=0
    #allocation2 [shape = 'u8[8192]{0}', space=vmem, size = 0x2000, scoped, tag = 'input window, operand 0, single buffered']
    #allocation3 [shape = 's32[1]{0}', space=sflag, size = 0x4, scoped, tag = 'scoped memory for tpu_custom_call.1']
    #allocation4 [shape = 's32[1]{0}', space=sflag, size = 0x4, scoped, tag = 'scoped memory for tpu_custom_call.1']
    #allocation5 [shape = 'u8[8192]{0}', space=vmem, size = 0x2000, scoped, tag = 'output window, operand 0, single buffered']
    %6 = vsyncpa [#allocation3], 0
    %7 = vsyncpa [#allocation4], 0
    // Predicated region
    $region2: #{tpu_custom_call.1} parent=1 // pred_check
      _
    $region3: #{tpu_custom_call.1} parent=1 // pred_check_branch
      %9 = sbr.rel (0) target = $region5
    $region4: #{tpu_custom_call.1} parent=1 // pred_region
      %11 = vsyncadd [#allocation3], 0
      %s13 = sshll.u32 %s0, 4
      %s14 = int_to_ptr.hbm [resolvable:$true] %s13
      %s15 = sshll.u32 [#allocation2], 4
      %s16 = int_to_ptr.vmem [resolvable:$true] %s15
      %18 = dma.hbm_to_vmem [thread:$0]  %s14, 256, %s16, [#allocation3]
    $region5: #{tpu_custom_call.1} parent=1 // pred_fallthru
      _
    // Predicated region
    $region6: #{tpu_custom_call.1} parent=1 // pred_check
      _
    $region7: #{tpu_custom_call.1} parent=1 // pred_check_branch
      %20 = sbr.rel (0) target = $region9
    $region8: #{tpu_custom_call.1} parent=1 // pred_region
      %22 = dma.done [#allocation3], 256
    $region9: #{tpu_custom_call.1} parent=1 // pred_fallthru
      _
    %v23 = vld [vmem:[#allocation2] sm:$0xff]
    %v24 = vld [vmem:[#allocation2 + $0x8] sm:$0xff]
    %25 = vst [vmem:[#allocation5] sm:$0xff] %v23
    %26 = vst [vmem:[#allocation5 + $0x8] sm:$0xff] %v24
    // Predicated region
    $region10: #{tpu_custom_call.1} parent=1 // pred_check
      _
    $region11: #{tpu_custom_call.1} parent=1 // pred_check_branch
      %28 = sbr.rel (0) target = $region13
    $region12: #{tpu_custom_call.1} parent=1 // pred_region
      %30 = vsyncadd [#allocation4], 0
      %s32 = sshll.u32 [#allocation5], 4
      %s33 = int_to_ptr.vmem [resolvable:$true] %s32
      %s34 = sshll.u32 %s1, 4
      %s35 = int_to_ptr.hbm [resolvable:$true] %s34
      %37 = dma.vmem_to_hbm [thread:$0]  %s33, 256, %s35, [#allocation4]
    $region13: #{tpu_custom_call.1} parent=1 // pred_fallthru
      _
    // Predicated region
    $region14: #{tpu_custom_call.1} parent=1 // pred_check
      _
    $region15: #{tpu_custom_call.1} parent=1 // pred_check_branch
      %39 = sbr.rel (0) target = $region17
    $region16: #{tpu_custom_call.1} parent=1 // pred_region
      %41 = dma.done [#allocation4], 256
    $region17: #{tpu_custom_call.1} parent=1 // pred_fallthru
      _
    %42 = vsyncpa [#allocation3], 1
    %43 = vsyncpa [#allocation4], 1

</llo_original>
